<compile_context>
chip_gen: v5e
topology: v5e:2x2
jax: 0.10.0
libtpu: 0.0.40
codegen_flags: <defaults>
</compile_context>

<pallas_src>
import functools

import jax
import jax.numpy as jnp
from jax.experimental import pallas as pl
from jax.experimental.pallas import tpu as pltpu


_VMEM_PLAN_BUDGET = 24 * 1024 * 1024   # planning budget (conservative for v7x 64 MiB/TC)
_VMEM_LIMIT_BYTES = 32 * 1024 * 1024   # explicit scoped-VMEM limit handed to Mosaic


def _round_up(x, m):
    return (x + m - 1) // m * m


def _row_mask(i, ts, s_actual):
    """[ts,1] f32 mask: 1.0 for rows that exist in the un-padded sequence."""
    rows = jax.lax.broadcasted_iota(jnp.int32, (ts, 1), 0) + i * ts
    return (rows < s_actual).astype(jnp.float32)


def _compute_tile(q, meta_ref, wq_ref, wm_ref, bq_ref, bm_ref, two_d):
    """Fused gate/linear math for one [TS, D] tile. Returns (query_l, H)."""
    m = meta_ref.shape[0]
    # metadata_states.mean(dim=0): slice-wise f32 accumulation keeps the live
    # set to one [TS, D] f32 tile (bounded vreg pressure).
    acc = meta_ref[0].astype(jnp.float32)
    for k in range(1, m):
        acc = acc + meta_ref[k].astype(jnp.float32)
    meta_m = (acc * jnp.float32(1.0 / m)).astype(jnp.bfloat16)

    # Two wide MXU calls (N = 4D), f32 accumulate.  The gating concat is folded
    # into the fused weights: [Wg_top | Wq^T] (query side), [Wg_bot | Wl^T] (meta side).
    q_out = jnp.dot(q, wq_ref[...], preferred_element_type=jnp.float32) + bq_ref[...]
    m_out = jnp.dot(meta_m, wm_ref[...], preferred_element_type=jnp.float32) + bm_ref[...]

    g_v = jnp.tanh(q_out[:, :two_d] + m_out[:, :two_d])   # gating_linear + tanh
    q_l = q_out[:, two_d:]                                # linear_q(query)
    h = g_v * m_out[:, two_d:]                            # g_v * linear(meta_m)
    return q_l, h


# ---------------------------------------------------------------------------
# Fused single-call kernel: grid = (phase, tile), slab lives in VMEM scratch
# ---------------------------------------------------------------------------
def _mag_fused_kernel(q_ref, meta_ref, wq_ref, wm_ref, bq_ref, bm_ref,
                      ln_g_ref, ln_b_ref, out_ref,
                      slab_ref, psum_ref, alpha_ref,
                      *, s_actual, mask_tail):
    p = pl.program_id(0)     # 0 = compute phase, 1 = finalize phase
    i = pl.program_id(1)     # sequence tile
    ts, two_d = out_ref.shape

    @pl.when(p == 0)
    def _compute_phase():
        @pl.when(i == 0)
        def _init():
            psum_ref[...] = jnp.zeros_like(psum_ref)

        q_l, h = _compute_tile(q_ref[...], meta_ref, wq_ref, wm_ref,
                               bq_ref, bm_ref, two_d)

        # Stash the tile in the VMEM-resident slab (no HBM round trip).
        slab_ref[i, :, :two_d] = q_l
        slab_ref[i, :, two_d:] = h

        if mask_tail:                      # zero padded rows' norm contribution
            valid = _row_mask(i, ts, s_actual)
            q_l = q_l * valid
            h = h * valid
        psum_ref[:, :two_d] += jnp.sum(q_l * q_l, axis=0, keepdims=True)
        psum_ref[:, two_d:] += jnp.sum(h * h, axis=0, keepdims=True)

    @pl.when(p == 1)
    def _finalize_phase():
        @pl.when(i == 0)
        def _alpha():
            psum = psum_ref[...]
            sum_q = jnp.sum(psum[:, :two_d], axis=-1, keepdims=True)   # (1,1)
            sum_h = jnp.sum(psum[:, two_d:], axis=-1, keepdims=True)
            # alpha = min(||query_l||_F / ||H||_F * 0.5, 1)  (rsqrt -> EUP slot).
            # If ||H|| == 0 this is inf and clamps to 1 (matches reference's
            # divide-by-zero behaviour).
            alpha_ref[...] = jnp.minimum(
                jnp.float32(0.5) * jnp.sqrt(sum_q) * jax.lax.rsqrt(sum_h),
                jnp.float32(1.0))

        alpha = alpha_ref[...]             # (1,1), broadcasts
        tile = slab_ref[i]
        q_l = tile[:, :two_d]
        h = tile[:, two_d:]
        z = q_l + alpha * h

        # LayerNorm over last dim (eps = 1e-5, nn.LayerNorm default).
        mu = jnp.mean(z, axis=-1, keepdims=True)
        var = jnp.mean((z - mu) ** 2, axis=-1, keepdims=True)
        zn = (z - mu) * jax.lax.rsqrt(var + jnp.float32(1e-5))
        # Dropout in eval mode = identity.
        out_ref[...] = (zn * ln_g_ref[...] + ln_b_ref[...]).astype(out_ref.dtype)


# ---------------------------------------------------------------------------
# Two-pass fallback (large S): bf16 slab round trip, alpha hoisted to wrapper
# ---------------------------------------------------------------------------
def _mag_pass1_kernel(q_ref, meta_ref, wq_ref, wm_ref, bq_ref, bm_ref,
                      slab_ref, psum_ref, *, s_actual, mask_tail):
    i = pl.program_id(0)
    ts = slab_ref.shape[0]
    two_d = slab_ref.shape[-1] // 2

    @pl.when(i == 0)
    def _init():
        psum_ref[...] = jnp.zeros_like(psum_ref)

    q_l, h = _compute_tile(q_ref[...], meta_ref, wq_ref, wm_ref,
                           bq_ref, bm_ref, two_d)

    # bf16 slab halves the dominant HBM stream; norms stay f32 via psum.
    slab_ref[:, :two_d] = q_l.astype(slab_ref.dtype)
    slab_ref[:, two_d:] = h.astype(slab_ref.dtype)

    if mask_tail:
        valid = _row_mask(i, ts, s_actual)
        q_l = q_l * valid
        h = h * valid
    psum_ref[:, :two_d] += jnp.sum(q_l * q_l, axis=0, keepdims=True)
    psum_ref[:, two_d:] += jnp.sum(h * h, axis=0, keepdims=True)


def _mag_pass2_kernel(slab_ref, alpha_ref, ln_g_ref, ln_b_ref, out_ref):
    two_d = out_ref.shape[-1]
    slab = slab_ref[...].astype(jnp.float32)
    q_l = slab[:, :two_d]
    h = slab[:, two_d:]

    z = q_l + alpha_ref[...] * h          # alpha precomputed in the wrapper
    mu = jnp.mean(z, axis=-1, keepdims=True)
    var = jnp.mean((z - mu) ** 2, axis=-1, keepdims=True)
    zn = (z - mu) * jax.lax.rsqrt(var + jnp.float32(1e-5))
    out_ref[...] = (zn * ln_g_ref[...] + ln_b_ref[...]).astype(out_ref.dtype)


# ---------------------------------------------------------------------------
# VMEM-aware tile / path planner
# ---------------------------------------------------------------------------
def _plan_tiles(S, D, M, out_bytes, *, tile_s=None, force_two_pass=False):
    """Returns (TS, nt, S_pad, use_fused)."""
    four_d = 4 * D

    def tile_bytes(ts):
        streamed = 2 * (ts * D * 2) + 2 * (M * ts * D * 2)   # q + meta (bf16, dbl-buffered)
        out_b = 2 * (ts * 2 * D * out_bytes)                 # output tile (dbl-buffered)
        weights = 4 * (D * four_d * 2) + 8 * four_d * 4      # fused weights + biases / LN
        temps = 4 * ts * four_d * 4                          # q_out / m_out / g_v / H f32 temps
        return streamed + out_b + weights + temps

    s_cap = _round_up(S, 8)
    if tile_s is not None:
        ts = min(_round_up(tile_s, 8), s_cap)
    else:
        ts = 8
        for cand in (2048, 1024, 512, 256, 128, 64, 32, 16, 8):
            c = min(cand, s_cap)
            if tile_bytes(c) <= _VMEM_PLAN_BUDGET:
                ts = c
                break

    nt = pl.cdiv(S, ts)
    s_pad = nt * ts
    slab_bytes = nt * ts * four_d * 4                        # f32 VMEM-resident slab
    use_fused = (not force_two_pass) and (slab_bytes + tile_bytes(ts) <= _VMEM_PLAN_BUDGET)
    return ts, nt, s_pad, use_fused


# ---------------------------------------------------------------------------
# Wrapper
# ---------------------------------------------------------------------------
def multimodal_adaptation_gate(query, metadata_states,
                               wg, bg, wl, bl, wq, bq, ln_gamma, ln_beta,
                               *, out_dtype=None, tile_s=None,
                               force_two_pass=False):
    """query: [1, S, D], metadata_states: [M, S, D] -> [1, S, 2D].

    Weights are in PyTorch layout ([out, in]); packing into the fused bf16
    [D, 4D] matrices happens here in the wrapper.
    """
    _, S, D = query.shape
    M = metadata_states.shape[0]
    two_d, four_d = 2 * D, 4 * D
    if out_dtype is None:
        out_dtype = query.dtype

    # Fused weights: query side = [Wg_top | Wq^T], meta side = [Wg_bot | Wl^T].
    wg_t = wg.T                                                   # [2D_in, 2D_out]
    w_q_fused = jnp.concatenate([wg_t[:D, :], wq.T], axis=1).astype(jnp.bfloat16)
    w_m_fused = jnp.concatenate([wg_t[D:, :], wl.T], axis=1).astype(jnp.bfloat16)
    b_q_fused = jnp.concatenate([bg, bq])[None, :].astype(jnp.float32)
    b_m_fused = jnp.concatenate([jnp.zeros((two_d,), jnp.float32), bl]
                                )[None, :].astype(jnp.float32)
    ln_g = ln_gamma[None, :].astype(jnp.float32)
    ln_b = ln_beta[None, :].astype(jnp.float32)

    TS, nt, S_pad, use_fused = _plan_tiles(
        S, D, M, jnp.dtype(out_dtype).itemsize,
        tile_s=tile_s, force_two_pass=force_two_pass)
    mask_tail = S_pad != S

    q2d = query[0].astype(jnp.bfloat16)                           # [S, D]
    meta_bf = metadata_states.astype(jnp.bfloat16)                # [M, S, D]
    if mask_tail:
        q2d = jnp.pad(q2d, ((0, S_pad - S), (0, 0)))
        meta_bf = jnp.pad(meta_bf, ((0, 0), (0, S_pad - S), (0, 0)))

    if use_fused:
        # Single pallas_call: grid axis 0 is the phase (0 = compute, 1 = finalize);
        # the [nt,TS,4D] slab stays in VMEM scratch -> no HBM slab round trip.
        # During phase 1 the input index_maps pin block 0 so no extra tiles stream.
        out = pl.pallas_call(
            functools.partial(_mag_fused_kernel, s_actual=S, mask_tail=mask_tail),
            grid=(2, nt),
            in_specs=[
                pl.BlockSpec((TS, D), lambda p, i: (i * (1 - p), 0)),
                pl.BlockSpec((M, TS, D), lambda p, i: (0, i * (1 - p), 0)),
                pl.BlockSpec((D, four_d), lambda p, i: (0, 0)),
                pl.BlockSpec((D, four_d), lambda p, i: (0, 0)),
                pl.BlockSpec((1, four_d), lambda p, i: (0, 0)),
                pl.BlockSpec((1, four_d), lambda p, i: (0, 0)),
                pl.BlockSpec((1, two_d), lambda p, i: (0, 0)),
                pl.BlockSpec((1, two_d), lambda p, i: (0, 0)),
            ],
            out_specs=pl.BlockSpec((TS, two_d), lambda p, i: (i * p, 0)),
            out_shape=jax.ShapeDtypeStruct((S_pad, two_d), out_dtype),
            scratch_shapes=[
                pltpu.VMEM((nt, TS, four_d), jnp.float32),   # resident [query_l | H] slab
                pltpu.VMEM((1, four_d), jnp.float32),        # per-lane norm partials
                pltpu.VMEM((1, 1), jnp.float32),             # alpha
            ],
            compiler_params=pltpu.CompilerParams(
                dimension_semantics=("arbitrary", "arbitrary"),
                vmem_limit_bytes=_VMEM_LIMIT_BYTES),
        )(q2d, meta_bf, w_q_fused, w_m_fused, b_q_fused, b_m_fused, ln_g, ln_b)
        return out[None, :S, :]

    # ---- large-S fallback: two passes with a bf16 slab through HBM ----
    slab, psum = pl.pallas_call(
        functools.partial(_mag_pass1_kernel, s_actual=S, mask_tail=mask_tail),
        grid=(nt,),
        in_specs=[
            pl.BlockSpec((TS, D), lambda i: (i, 0)),
            pl.BlockSpec((M, TS, D), lambda i: (0, i, 0)),
            pl.BlockSpec((D, four_d), lambda i: (0, 0)),
            pl.BlockSpec((D, four_d), lambda i: (0, 0)),
            pl.BlockSpec((1, four_d), lambda i: (0, 0)),
            pl.BlockSpec((1, four_d), lambda i: (0, 0)),
        ],
        out_specs=(
            pl.BlockSpec((TS, four_d), lambda i: (i, 0)),
            pl.BlockSpec((1, four_d), lambda i: (0, 0)),
        ),
        out_shape=(
            jax.ShapeDtypeStruct((S_pad, four_d), jnp.bfloat16),   # bf16 slab
            jax.ShapeDtypeStruct((1, four_d), jnp.float32),
        ),
        compiler_params=pltpu.CompilerParams(
            dimension_semantics=("arbitrary",),                    # psum accumulator
            vmem_limit_bytes=_VMEM_LIMIT_BYTES),
    )(q2d, meta_bf, w_q_fused, w_m_fused, b_q_fused, b_m_fused)

    # alpha hoisted out of pass 2: one tiny XLA reduction between the calls.
    sum_q = jnp.sum(psum[:, :two_d])
    sum_h = jnp.sum(psum[:, two_d:])
    alpha = jnp.minimum(0.5 * jnp.sqrt(sum_q) / jnp.sqrt(sum_h), 1.0)
    alpha = alpha.reshape(1, 1).astype(jnp.float32)

    out = pl.pallas_call(
        _mag_pass2_kernel,
        grid=(nt,),
        in_specs=[
            pl.BlockSpec((TS, four_d), lambda i: (i, 0)),
            pl.BlockSpec((1, 1), lambda i: (0, 0)),
            pl.BlockSpec((1, two_d), lambda i: (0, 0)),
            pl.BlockSpec((1, two_d), lambda i: (0, 0)),
        ],
        out_specs=pl.BlockSpec((TS, two_d), lambda i: (i, 0)),
        out_shape=jax.ShapeDtypeStruct((S_pad, two_d), out_dtype),
        compiler_params=pltpu.CompilerParams(
            dimension_semantics=("parallel",),                     # tiles independent
            vmem_limit_bytes=_VMEM_LIMIT_BYTES),
    )(slab, alpha, ln_g, ln_b)

    return out[None, :S, :]


def _init_linear(key, fan_in, fan_out):
    # Deterministic stand-in for PyTorch's default Linear init (uniform +-1/sqrt(fan_in)).
    kw, kb = jax.random.split(key)
    bound = 1.0 / jnp.sqrt(fan_in)
    w = jax.random.uniform(kw, (fan_out, fan_in), jnp.float32, -bound, bound)  # torch [out, in]
    b = jax.random.uniform(kb, (fan_out,), jnp.float32, -bound, bound)
    return w, b


if __name__ == "__main__":
    # params['text_encoder'] == 'lstm' -> output_size = hidden_size.
    hidden_size = 64
    D = hidden_size
    M = 4                     # number of metadata states (mean-reduced dim)

    key = jax.random.PRNGKey(0)
    k_g, k_l, k_lq, k_q1, k_m1, k_q3, k_m3 = jax.random.split(key, 7)

    # Parameters in PyTorch layout.
    wg, bg = _init_linear(k_g, 2 * D, 2 * D)     # gating_linear
    wl, bl = _init_linear(k_l, D, 2 * D)         # linear
    wq, bq = _init_linear(k_lq, D, 2 * D)        # linear_q
    ln_gamma = jnp.ones((2 * D,), jnp.float32)   # layer_norm weight
    ln_beta = jnp.zeros((2 * D,), jnp.float32)   # layer_norm bias

    # Pure-JAX f32 reference (faithful to the PyTorch forward, eval mode).
    def ref(q, meta):
        mm = jnp.mean(meta, axis=0, keepdims=True)
        cat = jnp.concatenate([q, mm], axis=2)
        g_v = jnp.tanh(cat @ wg.T + bg)
        H = mm @ wl.T + bl
        H = g_v * H
        q_l = q @ wq.T + bq
        norms = jnp.linalg.norm(q_l) / jnp.linalg.norm(H) * 0.5
        alpha = jnp.minimum(norms, 1.0)
        Z = q_l + alpha * H
        mu = jnp.mean(Z, axis=-1, keepdims=True)
        var = jnp.mean((Z - mu) ** 2, axis=-1, keepdims=True)
        Z = (Z - mu) / jnp.sqrt(var + 1e-5)
        return Z * ln_gamma + ln_beta

    args = (wg, bg, wl, bl, wq, bq, ln_gamma, ln_beta)

    # 1) demo shape, fused single-kernel path (slab never touches HBM).
    q1 = jax.random.normal(k_q1, (1, 8, D), jnp.float32)
    m1 = jax.random.normal(k_m1, (M, 8, D), jnp.float32)
    out1 = jax.block_until_ready(multimodal_adaptation_gate(q1, m1, *args))
    assert out1.shape == (1, 8, 2 * D)
    assert jnp.allclose(out1, ref(q1, m1), atol=3e-2, rtol=3e-2)

    # 2) same inputs through the two-pass (bf16 HBM slab) fallback.
    out2 = jax.block_until_ready(
        multimodal_adaptation_gate(q1, m1, *args, force_two_pass=True))
    assert jnp.allclose(out2, ref(q1, m1), atol=5e-2, rtol=5e-2)

    # 3) non-divisible S with a multi-tile grid (padding + row masking), fused.
    q3 = jax.random.normal(k_q3, (1, 40, D), jnp.float32)
    m3 = jax.random.normal(k_m3, (M, 40, D), jnp.float32)
    out3 = jax.block_until_ready(
        multimodal_adaptation_gate(q3, m3, *args, tile_s=16))
    assert out3.shape == (1, 40, 2 * D)
    assert jnp.allclose(out3, ref(q3, m3), atol=3e-2, rtol=3e-2)

    # 4) same padded multi-tile case through the two-pass fallback.
    out4 = jax.block_until_ready(
        multimodal_adaptation_gate(q3, m3, *args, tile_s=16, force_two_pass=True))
    assert jnp.allclose(out4, ref(q3, m3), atol=5e-2, rtol=5e-2)

    print("KERNEL_OK")
</pallas_src>

<mosaic_0001>
module attributes {stable_mosaic.version = 11 : i64} {
  func.func @_mag_fused_kernel(%arg0: i32, %arg1: i32, %arg2: memref<8x64xbf16, #tpu.memory_space<vmem>>, %arg3: memref<4x8x64xbf16, #tpu.memory_space<vmem>>, %arg4: memref<64x256xbf16, #tpu.memory_space<vmem>>, %arg5: memref<64x256xbf16, #tpu.memory_space<vmem>>, %arg6: memref<1x256xf32, #tpu.memory_space<vmem>>, %arg7: memref<1x256xf32, #tpu.memory_space<vmem>>, %arg8: memref<1x128xf32, #tpu.memory_space<vmem>>, %arg9: memref<1x128xf32, #tpu.memory_space<vmem>>, %arg10: memref<8x128xf32, #tpu.memory_space<vmem>>, %arg11: memref<1x8x256xf32, #tpu.memory_space<vmem>>, %arg12: memref<1x256xf32, #tpu.memory_space<vmem>>, %arg13: memref<1x1xf32, #tpu.memory_space<vmem>>) attributes {dimension_semantics = [#tpu.dimension_semantics<arbitrary>, #tpu.dimension_semantics<arbitrary>], iteration_bounds = array<i64: 2, 1>, scalar_prefetch = 0 : i64, scratch_operands = 3 : i64, tpu.core_type = #tpu.core_type<tc>, window_params = [{transform_indices = @transform_0, window_bounds = array<i64: 8, 64>}, {transform_indices = @transform_1, window_bounds = array<i64: 4, 8, 64>}, {pipeline_mode = #tpu.pipeline_mode<synchronous>, transform_indices = @transform_2, window_bounds = array<i64: 64, 256>}, {pipeline_mode = #tpu.pipeline_mode<synchronous>, transform_indices = @transform_3, window_bounds = array<i64: 64, 256>}, {pipeline_mode = #tpu.pipeline_mode<synchronous>, transform_indices = @transform_4, window_bounds = array<i64: 1, 256>}, {pipeline_mode = #tpu.pipeline_mode<synchronous>, transform_indices = @transform_5, window_bounds = array<i64: 1, 256>}, {pipeline_mode = #tpu.pipeline_mode<synchronous>, transform_indices = @transform_6, window_bounds = array<i64: 1, 128>}, {pipeline_mode = #tpu.pipeline_mode<synchronous>, transform_indices = @transform_7, window_bounds = array<i64: 1, 128>}, {transform_indices = @transform_8, window_bounds = array<i64: 8, 128>}]} {
    %c0_i32 = arith.constant 0 : i32
    %0 = arith.cmpi eq, %arg0, %c0_i32 : i32
    %1 = arith.extui %0 : i1 to i32
    %c0_i32_0 = arith.constant 0 : i32
    %2 = arith.cmpi ne, %1, %c0_i32_0 : i32
    scf.if %2 {
      %c0_i32_2 = arith.constant 0 : i32
      %6 = arith.cmpi eq, %arg1, %c0_i32_2 : i32
      %7 = arith.extui %6 : i1 to i32
      %c0_i32_3 = arith.constant 0 : i32
      %8 = arith.cmpi ne, %7, %c0_i32_3 : i32
      scf.if %8 {
        %cst_37 = arith.constant 0.000000e+00 : f32
        %65 = vector.broadcast %cst_37 : f32 to vector<1x256xf32>
        %c0_38 = arith.constant 0 : index
        %c0_39 = arith.constant 0 : index
        %66 = vector.load %arg12[%c0_38, %c0_39] : memref<1x256xf32, #tpu.memory_space<vmem>>, vector<1x256xf32>
        tpu.vector_store %arg12[%c0_38, %c0_39], %65 {strides = array<i32>} : memref<1x256xf32, #tpu.memory_space<vmem>>, vector<1x256xf32>,
      } else {
      }
      %c0 = arith.constant 0 : index
      %c0_4 = arith.constant 0 : index
      %9 = vector.load %arg2[%c0, %c0_4] : memref<8x64xbf16, #tpu.memory_space<vmem>>, vector<8x64xbf16>
      %c0_5 = arith.constant 0 : index
      %c0_6 = arith.constant 0 : index
      %c0_7 = arith.constant 0 : index
      %10 = vector.load %arg3[%c0_5, %c0_6, %c0_7] : memref<4x8x64xbf16, #tpu.memory_space<vmem>>, vector<1x8x64xbf16>
      %11 = vector.shape_cast %10 : vector<1x8x64xbf16> to vector<8x64xbf16>
      %12 = arith.extf %11 : vector<8x64xbf16> to vector<8x64xf32>
      %c1 = arith.constant 1 : index
      %c0_8 = arith.constant 0 : index
      %c0_9 = arith.constant 0 : index
      %13 = vector.load %arg3[%c1, %c0_8, %c0_9] : memref<4x8x64xbf16, #tpu.memory_space<vmem>>, vector<1x8x64xbf16>
      %14 = vector.shape_cast %13 : vector<1x8x64xbf16> to vector<8x64xbf16>
      %15 = arith.extf %14 : vector<8x64xbf16> to vector<8x64xf32>
      %16 = arith.addf %12, %15 : vector<8x64xf32>
      %c2 = arith.constant 2 : index
      %c0_10 = arith.constant 0 : index
      %c0_11 = arith.constant 0 : index
      %17 = vector.load %arg3[%c2, %c0_10, %c0_11] : memref<4x8x64xbf16, #tpu.memory_space<vmem>>, vector<1x8x64xbf16>
      %18 = vector.shape_cast %17 : vector<1x8x64xbf16> to vector<8x64xbf16>
      %19 = arith.extf %18 : vector<8x64xbf16> to vector<8x64xf32>
      %20 = arith.addf %16, %19 : vector<8x64xf32>
      %c3 = arith.constant 3 : index
      %c0_12 = arith.constant 0 : index
      %c0_13 = arith.constant 0 : index
      %21 = vector.load %arg3[%c3, %c0_12, %c0_13] : memref<4x8x64xbf16, #tpu.memory_space<vmem>>, vector<1x8x64xbf16>
      %22 = vector.shape_cast %21 : vector<1x8x64xbf16> to vector<8x64xbf16>
      %23 = arith.extf %22 : vector<8x64xbf16> to vector<8x64xf32>
      %24 = arith.addf %20, %23 : vector<8x64xf32>
      %cst = arith.constant 2.500000e-01 : f32
      %25 = vector.broadcast %cst : f32 to vector<8x64xf32>
      %26 = arith.mulf %24, %25 : vector<8x64xf32>
      %27 = arith.truncf %26 : vector<8x64xf32> to vector<8x64xbf16>
      %c0_14 = arith.constant 0 : index
      %c0_15 = arith.constant 0 : index
      %28 = vector.load %arg4[%c0_14, %c0_15] : memref<64x256xbf16, #tpu.memory_space<vmem>>, vector<64x256xbf16>
      %cst_16 = arith.constant dense<0.000000e+00> : vector<8x256xf32>
      %29 = tpu.matmul %9, %28, %cst_16 {dimension_numbers = #tpu.dot_dimension_numbers<[1], [0], [0], [1], [0, 0, 1, 1], [], []>} : vector<8x64xbf16>, vector<64x256xbf16>, vector<8x256xf32> -> vector<8x256xf32>
      %c0_17 = arith.constant 0 : index
      %c0_18 = arith.constant 0 : index
      %30 = vector.load %arg6[%c0_17, %c0_18] : memref<1x256xf32, #tpu.memory_space<vmem>>, vector<1x256xf32>
      %31 = vector.broadcast %30 : vector<1x256xf32> to vector<8x256xf32>
      %32 = arith.addf %29, %31 : vector<8x256xf32>
      %c0_19 = arith.constant 0 : index
      %c0_20 = arith.constant 0 : index
      %33 = vector.load %arg5[%c0_19, %c0_20] : memref<64x256xbf16, #tpu.memory_space<vmem>>, vector<64x256xbf16>
      %cst_21 = arith.constant dense<0.000000e+00> : vector<8x256xf32>
      %34 = tpu.matmul %27, %33, %cst_21 {dimension_numbers = #tpu.dot_dimension_numbers<[1], [0], [0], [1], [0, 0, 1, 1], [], []>} : vector<8x64xbf16>, vector<64x256xbf16>, vector<8x256xf32> -> vector<8x256xf32>
      %c0_22 = arith.constant 0 : index
      %c0_23 = arith.constant 0 : index
      %35 = vector.load %arg7[%c0_22, %c0_23] : memref<1x256xf32, #tpu.memory_space<vmem>>, vector<1x256xf32>
      %36 = vector.broadcast %35 : vector<1x256xf32> to vector<8x256xf32>
      %37 = arith.addf %34, %36 : vector<8x256xf32>
      %38 = vector.extract_strided_slice %32 {offsets = [0, 0], sizes = [8, 128], strides = [1, 1]} : vector<8x256xf32> to vector<8x128xf32>
      %39 = vector.extract_strided_slice %37 {offsets = [0, 0], sizes = [8, 128], strides = [1, 1]} : vector<8x256xf32> to vector<8x128xf32>
      %40 = arith.addf %38, %39 : vector<8x128xf32>
      %41 = math.tanh %40 : vector<8x128xf32>
      %42 = vector.extract_strided_slice %32 {offsets = [0, 128], sizes = [8, 128], strides = [1, 1]} : vector<8x256xf32> to vector<8x128xf32>
      %43 = vector.extract_strided_slice %37 {offsets = [0, 128], sizes = [8, 128], strides = [1, 1]} : vector<8x256xf32> to vector<8x128xf32>
      %44 = arith.mulf %41, %43 : vector<8x128xf32>
      %45 = arith.index_cast %arg1 : i32 to index
      %c0_24 = arith.constant 0 : index
      %c0_25 = arith.constant 0 : index
      %46 = vector.load %arg11[%45, %c0_24, %c0_25] : memref<1x8x256xf32, #tpu.memory_space<vmem>>, vector<1x8x128xf32>
      %47 = vector.shape_cast %46 : vector<1x8x128xf32> to vector<8x128xf32>
      %48 = vector.shape_cast %42 : vector<8x128xf32> to vector<1x8x128xf32>
      tpu.vector_store %arg11[%45, %c0_24, %c0_25], %48 {strides = array<i32>} : memref<1x8x256xf32, #tpu.memory_space<vmem>>, vector<1x8x128xf32>,
      %49 = arith.index_cast %arg1 : i32 to index
      %c0_26 = arith.constant 0 : index
      %c128 = arith.constant 128 : index
      %50 = vector.load %arg11[%49, %c0_26, %c128] : memref<1x8x256xf32, #tpu.memory_space<vmem>>, vector<1x8x128xf32>
      %51 = vector.shape_cast %50 : vector<1x8x128xf32> to vector<8x128xf32>
      %52 = vector.shape_cast %44 : vector<8x128xf32> to vector<1x8x128xf32>
      tpu.vector_store %arg11[%49, %c0_26, %c128], %52 {strides = array<i32>} : memref<1x8x256xf32, #tpu.memory_space<vmem>>, vector<1x8x128xf32>,
      %c0_27 = arith.constant 0 : index
      %c0_28 = arith.constant 0 : index
      %53 = vector.load %arg12[%c0_27, %c0_28] : memref<1x256xf32, #tpu.memory_space<vmem>>, vector<1x128xf32>
      %54 = arith.mulf %42, %42 : vector<8x128xf32>
      %cst_29 = arith.constant dense<0.000000e+00> : vector<128xf32>
      %55 = vector.multi_reduction <add>, %54, %cst_29 [0] : vector<8x128xf32> to vector<128xf32>
      %56 = vector.shape_cast %55 : vector<128xf32> to vector<1x128xf32>
      %57 = arith.addf %53, %56 : vector<1x128xf32>
      %c0_30 = arith.constant 0 : index
      %c0_31 = arith.constant 0 : index
      %58 = vector.load %arg12[%c0_30, %c0_31] : memref<1x256xf32, #tpu.memory_space<vmem>>, vector<1x128xf32>
      tpu.vector_store %arg12[%c0_30, %c0_31], %57 {strides = array<i32>} : memref<1x256xf32, #tpu.memory_space<vmem>>, vector<1x128xf32>,
      %c0_32 = arith.constant 0 : index
      %c128_33 = arith.constant 128 : index
      %59 = vector.load %arg12[%c0_32, %c128_33] : memref<1x256xf32, #tpu.memory_space<vmem>>, vector<1x128xf32>
      %60 = arith.mulf %44, %44 : vector<8x128xf32>
      %cst_34 = arith.constant dense<0.000000e+00> : vector<128xf32>
      %61 = vector.multi_reduction <add>, %60, %cst_34 [0] : vector<8x128xf32> to vector<128xf32>
      %62 = vector.shape_cast %61 : vector<128xf32> to vector<1x128xf32>
      %63 = arith.addf %59, %62 : vector<1x128xf32>
      %c0_35 = arith.constant 0 : index
      %c128_36 = arith.constant 128 : index
      %64 = vector.load %arg12[%c0_35, %c128_36] : memref<1x256xf32, #tpu.memory_space<vmem>>, vector<1x128xf32>
      tpu.vector_store %arg12[%c0_35, %c128_36], %63 {strides = array<i32>} : memref<1x256xf32, #tpu.memory_space<vmem>>, vector<1x128xf32>,
    } else {
    }
    %c1_i32 = arith.constant 1 : i32
    %3 = arith.cmpi eq, %arg0, %c1_i32 : i32
    %4 = arith.extui %3 : i1 to i32
    %c0_i32_1 = arith.constant 0 : i32
    %5 = arith.cmpi ne, %4, %c0_i32_1 : i32
    scf.if %5 {
      %c0_i32_2 = arith.constant 0 : i32
      %6 = arith.cmpi eq, %arg1, %c0_i32_2 : i32
      %7 = arith.extui %6 : i1 to i32
      %c0_i32_3 = arith.constant 0 : i32
      %8 = arith.cmpi ne, %7, %c0_i32_3 : i32
      scf.if %8 {
        %c0_17 = arith.constant 0 : index
        %c0_18 = arith.constant 0 : index
        %43 = vector.load %arg12[%c0_17, %c0_18] : memref<1x256xf32, #tpu.memory_space<vmem>>, vector<1x256xf32>
        %44 = vector.extract_strided_slice %43 {offsets = [0, 0], sizes = [1, 128], strides = [1, 1]} : vector<1x256xf32> to vector<1x128xf32>
        %cst_19 = arith.constant dense<0.000000e+00> : vector<1xf32>
        %45 = vector.multi_reduction <add>, %44, %cst_19 [1] : vector<1x128xf32> to vector<1xf32>
        %46 = vector.shape_cast %45 : vector<1xf32> to vector<1x1xf32>
        %47 = vector.extract_strided_slice %43 {offsets = [0, 128], sizes = [1, 128], strides = [1, 1]} : vector<1x256xf32> to vector<1x128xf32>
        %cst_20 = arith.constant dense<0.000000e+00> : vector<1xf32>
        %48 = vector.multi_reduction <add>, %47, %cst_20 [1] : vector<1x128xf32> to vector<1xf32>
        %49 = vector.shape_cast %48 : vector<1xf32> to vector<1x1xf32>
        %50 = math.sqrt %46 : vector<1x1xf32>
        %cst_21 = arith.constant 5.000000e-01 : f32
        %51 = vector.broadcast %cst_21 : f32 to vector<1x1xf32>
        %52 = arith.mulf %51, %50 : vector<1x1xf32>
        %53 = math.rsqrt %49 : vector<1x1xf32>
        %54 = arith.mulf %52, %53 : vector<1x1xf32>
        %cst_22 = arith.constant 1.000000e+00 : f32
        %55 = vector.broadcast %cst_22 : f32 to vector<1x1xf32>
        %56 = arith.minimumf %54, %55 : vector<1x1xf32>
        %c0_23 = arith.constant 0 : index
        %c0_24 = arith.constant 0 : index
        %57 = vector.load %arg13[%c0_23, %c0_24] : memref<1x1xf32, #tpu.memory_space<vmem>>, vector<1x1xf32>
        tpu.vector_store %arg13[%c0_23, %c0_24], %56 {strides = array<i32>} : memref<1x1xf32, #tpu.memory_space<vmem>>, vector<1x1xf32>,
      } else {
      }
      %c0 = arith.constant 0 : index
      %c0_4 = arith.constant 0 : index
      %9 = vector.load %arg13[%c0, %c0_4] : memref<1x1xf32, #tpu.memory_space<vmem>>, vector<1x1xf32>
      %10 = arith.index_cast %arg1 : i32 to index
      %c0_5 = arith.constant 0 : index
      %c0_6 = arith.constant 0 : index
      %11 = vector.load %arg11[%10, %c0_5, %c0_6] : memref<1x8x256xf32, #tpu.memory_space<vmem>>, vector<1x8x256xf32>
      %12 = vector.shape_cast %11 : vector<1x8x256xf32> to vector<8x256xf32>
      %13 = vector.extract_strided_slice %12 {offsets = [0, 0], sizes = [8, 128], strides = [1, 1]} : vector<8x256xf32> to vector<8x128xf32>
      %14 = vector.extract_strided_slice %12 {offsets = [0, 128], sizes = [8, 128], strides = [1, 1]} : vector<8x256xf32> to vector<8x128xf32>
      %15 = vector.broadcast %9 : vector<1x1xf32> to vector<8x128xf32>
      %16 = arith.mulf %15, %14 : vector<8x128xf32>
      %17 = arith.addf %13, %16 : vector<8x128xf32>
      %cst = arith.constant dense<0.000000e+00> : vector<8xf32>
      %18 = vector.multi_reduction <add>, %17, %cst [1] : vector<8x128xf32> to vector<8xf32>
      %19 = vector.shape_cast %18 : vector<8xf32> to vector<8x1xf32>
      %cst_7 = arith.constant 1.280000e+02 : f32
      %20 = vector.broadcast %cst_7 : f32 to vector<8x1xf32>
      %21 = arith.divf %19, %20 : vector<8x1xf32>
      %22 = vector.broadcast %21 : vector<8x1xf32> to vector<8x128xf32>
      %23 = arith.subf %17, %22 : vector<8x128xf32>
      %24 = arith.mulf %23, %23 : vector<8x128xf32>
      %cst_8 = arith.constant dense<0.000000e+00> : vector<8xf32>
      %25 = vector.multi_reduction <add>, %24, %cst_8 [1] : vector<8x128xf32> to vector<8xf32>
      %26 = vector.shape_cast %25 : vector<8xf32> to vector<8x1xf32>
      %cst_9 = arith.constant 1.280000e+02 : f32
      %27 = vector.broadcast %cst_9 : f32 to vector<8x1xf32>
      %28 = arith.divf %26, %27 : vector<8x1xf32>
      %29 = vector.broadcast %21 : vector<8x1xf32> to vector<8x128xf32>
      %30 = arith.subf %17, %29 : vector<8x128xf32>
      %cst_10 = arith.constant 9.99999974E-6 : f32
      %31 = vector.broadcast %cst_10 : f32 to vector<8x1xf32>
      %32 = arith.addf %28, %31 : vector<8x1xf32>
      %33 = math.rsqrt %32 : vector<8x1xf32>
      %34 = vector.broadcast %33 : vector<8x1xf32> to vector<8x128xf32>
      %35 = arith.mulf %30, %34 : vector<8x128xf32>
      %c0_11 = arith.constant 0 : index
      %c0_12 = arith.constant 0 : index
      %36 = vector.load %arg8[%c0_11, %c0_12] : memref<1x128xf32, #tpu.memory_space<vmem>>, vector<1x128xf32>
      %37 = vector.broadcast %36 : vector<1x128xf32> to vector<8x128xf32>
      %38 = arith.mulf %35, %37 : vector<8x128xf32>
      %c0_13 = arith.constant 0 : index
      %c0_14 = arith.constant 0 : index
      %39 = vector.load %arg9[%c0_13, %c0_14] : memref<1x128xf32, #tpu.memory_space<vmem>>, vector<1x128xf32>
      %40 = vector.broadcast %39 : vector<1x128xf32> to vector<8x128xf32>
      %41 = arith.addf %38, %40 : vector<8x128xf32>
      %c0_15 = arith.constant 0 : index
      %c0_16 = arith.constant 0 : index
      %42 = vector.load %arg10[%c0_15, %c0_16] : memref<8x128xf32, #tpu.memory_space<vmem>>, vector<8x128xf32>
      tpu.vector_store %arg10[%c0_15, %c0_16], %41 {strides = array<i32>} : memref<8x128xf32, #tpu.memory_space<vmem>>, vector<8x128xf32>,
    } else {
    }
    return
  }
  func.func @transform_0(%arg0: i32, %arg1: i32) -> (i32, i32) {
    %c1_i32 = arith.constant 1 : i32
    %0 = arith.subi %c1_i32, %arg0 : i32
    %1 = arith.muli %arg1, %0 : i32
    %c0_i32 = arith.constant 0 : i32
    %c0_i32_0 = arith.constant 0 : i32
    return %1, %c0_i32 : i32, i32
  }
  func.func @transform_1(%arg0: i32, %arg1: i32) -> (i32, i32, i32) {
    %c1_i32 = arith.constant 1 : i32
    %0 = arith.subi %c1_i32, %arg0 : i32
    %1 = arith.muli %arg1, %0 : i32
    %c0_i32 = arith.constant 0 : i32
    %c0_i32_0 = arith.constant 0 : i32
    %c0_i32_1 = arith.constant 0 : i32
    return %c0_i32, %1, %c0_i32_0 : i32, i32, i32
  }
  func.func @transform_2(%arg0: i32, %arg1: i32) -> (i32, i32) {
    %c0_i32 = arith.constant 0 : i32
    %c0_i32_0 = arith.constant 0 : i32
    %c0_i32_1 = arith.constant 0 : i32
    return %c0_i32, %c0_i32_0 : i32, i32
  }
  func.func @transform_3(%arg0: i32, %arg1: i32) -> (i32, i32) {
    %c0_i32 = arith.constant 0 : i32
    %c0_i32_0 = arith.constant 0 : i32
    %c0_i32_1 = arith.constant 0 : i32
    return %c0_i32, %c0_i32_0 : i32, i32
  }
  func.func @transform_4(%arg0: i32, %arg1: i32) -> (i32, i32) {
    %c0_i32 = arith.constant 0 : i32
    %c0_i32_0 = arith.constant 0 : i32
    %c0_i32_1 = arith.constant 0 : i32
    return %c0_i32, %c0_i32_0 : i32, i32
  }
  func.func @transform_5(%arg0: i32, %arg1: i32) -> (i32, i32) {
    %c0_i32 = arith.constant 0 : i32
    %c0_i32_0 = arith.constant 0 : i32
    %c0_i32_1 = arith.constant 0 : i32
    return %c0_i32, %c0_i32_0 : i32, i32
  }
  func.func @transform_6(%arg0: i32, %arg1: i32) -> (i32, i32) {
    %c0_i32 = arith.constant 0 : i32
    %c0_i32_0 = arith.constant 0 : i32
    %c0_i32_1 = arith.constant 0 : i32
    return %c0_i32, %c0_i32_0 : i32, i32
  }
  func.func @transform_7(%arg0: i32, %arg1: i32) -> (i32, i32) {
    %c0_i32 = arith.constant 0 : i32
    %c0_i32_0 = arith.constant 0 : i32
    %c0_i32_1 = arith.constant 0 : i32
    return %c0_i32, %c0_i32_0 : i32, i32
  }
  func.func @transform_8(%arg0: i32, %arg1: i32) -> (i32, i32) {
    %0 = arith.muli %arg1, %arg0 : i32
    %c0_i32 = arith.constant 0 : i32
    %c0_i32_0 = arith.constant 0 : i32
    return %0, %c0_i32 : i32, i32
  }
}

</mosaic_0001>

<llo_original>
// kernel: tpu_custom_call.1
$region0: #{tpu_custom_call.1}
  #allocation0 [shape = 'u32[]', space=smem, size = 0x4, offset = 0x4, fixed_abs, tag = 'smem constant byte address 0x4 - core index']
  #allocation1 [shape = 'u32[72,128]{1,0:T(1,128)}', space=vmem, size = 0x9000, scoped, tag = 'internal scratch']
  #allocation2 [shape = 'f32[1,8,256]{2,1,0:T(8,128)}', space=vmem, size = 0x2000, scoped, tag = 'scratch operand']
  #allocation3 [shape = 'f32[1,256]{1,0:T(1,128)}', space=vmem, size = 0x400, scoped, tag = 'scratch operand']
  #allocation4 [shape = 'f32[1,1]{1,0:T(1,128)}', space=vmem, size = 0x200, scoped, tag = 'scratch operand']
  %s0 = inlined_call_operand.hbm [shape: bf16[8,64], index: 0, kind: input, shape index: {}]
  %s1 = inlined_call_operand.hbm [shape: bf16[4,8,64], index: 1, kind: input, shape index: {}]
  %s2 = inlined_call_operand.hbm [shape: bf16[64,256], index: 2, kind: input, shape index: {}]
  %s3 = inlined_call_operand.hbm [shape: bf16[64,256], index: 3, kind: input, shape index: {}]
  %s4 = inlined_call_operand.vmem [shape: f32[1,256], index: 4, kind: input, shape index: {}]
  %s5 = inlined_call_operand.vmem [shape: f32[1,256], index: 5, kind: input, shape index: {}]
  %s6 = inlined_call_operand.vmem [shape: f32[1,128], index: 6, kind: input, shape index: {}]
  %s7 = inlined_call_operand.vmem [shape: f32[1,128], index: 7, kind: input, shape index: {}]
  %s8 = inlined_call_operand.hbm [shape: f32[8,128], index: 8, kind: output, shape index: {}]
  %s9 = sld [smem:[#allocation0]]
  $region97: #{tpu_custom_call.1} parent=0
    _
  %s11 = ssub.s32 1, %s9
  %s12 = scalar_select 0, %s11, %s9
  $region1: #{tpu_custom_call.1} parent=0
    #allocation5 [shape = 'u8[4096]{0}', space=vmem, size = 0x1000, scoped, tag = 'input window, operand 0']
    #allocation6 [shape = 's32[2]{0}', space=sflag, size = 0x8, scoped, tag = 'scoped memory for tpu_custom_call.1']
    #allocation7 [shape = 's32[2]{0}', space=sflag, size = 0x8, scoped, tag = 'scoped memory for tpu_custom_call.1']
    #allocation8 [shape = 'u8[16384]{0}', space=vmem, size = 0x4000, scoped, tag = 'input window, operand 1']
    #allocation9 [shape = 's32[2]{0}', space=sflag, size = 0x8, scoped, tag = 'scoped memory for tpu_custom_call.1']
    #allocation10 [shape = 'u8[32768]{0}', space=vmem, size = 0x8000, scoped, tag = 'input window, operand 2, single buffered']
    #allocation11 [shape = 'u8[32768]{0}', space=vmem, size = 0x8000, scoped, tag = 'input window, operand 3, single buffered']
    #allocation12 [shape = 's32[1]{0}', space=sflag, size = 0x4, scoped, tag = 'scoped memory for tpu_custom_call.1']
    #allocation13 [shape = 'u8[8192]{0}', space=vmem, size = 0x2000, scoped, tag = 'output window, operand 0']
    %13 = vsyncpa [#allocation6], 0
    %s14 = scalar_lea.sflag [#allocation6], 1
    %15 = vsyncpa %s14, 0
    %16 = vsyncpa [#allocation9], 0
    %s17 = scalar_lea.sflag [#allocation9], 1
    %18 = vsyncpa %s17, 0
    %19 = vsyncpa [#allocation12], 0
    %20 = vsyncpa [#allocation7], 0
    %s21 = scalar_lea.sflag [#allocation7], 1
    %22 = vsyncpa %s21, 0
    loop: start=0, step=1, limit=4
    $region2: #{tpu_custom_call.1} parent=1 // loop_pre_header
      _
    $region3: #{tpu_custom_call.1} parent=1 // loop_header
      %s24 = sphi 0, %s28
      %p25 = scmp.ge.s32.totalorder %s24, 4
      %s31 = sphi 0, %s43
      %s32 = sphi 0, %s39
      %s33 = sphi 0, %s31
      %s34 = sphi 0, %s32
      %s35 = sphi 0, %s33
      %s36 = sphi 0, %s34
      %s50 = sphi 0, %s52
      %s53 = sphi 0, %s50
      %s54 = sphi 0, %s53
      %s70 = sphi 0, %s54
      %s80 = sphi 0, %s82
      %s83 = sphi 0, %s80
      %s84 = sphi 0, %s83
      %s100 = sphi 0, %s84
      %s104 = sphi 0, %s104
      %s106 = sphi 0, %s104
      %s107 = sphi 0, %s106
      %s121 = sphi 0, %s107
      %s125 = sphi 0, %s125
      %s127 = sphi 0, %s125
      %s128 = sphi 0, %s127
      %s142 = sphi 0, %s128
      %s146 = sphi 0, %s146
      %s148 = sphi 0, %s146
      %s149 = sphi 0, %s148
      %s163 = sphi 0, %s149
      %s167 = sphi 0, %s167
      %s169 = sphi 0, %s167
      %s170 = sphi 0, %s169
      %s184 = sphi 0, %s170
      %s188 = sphi 0, %s188
      %s190 = sphi 0, %s188
      %s191 = sphi 0, %s190
      %s205 = sphi 0, %s191
      %s209 = sphi 0, %s209
      %s211 = sphi 0, %s209
      %s212 = sphi 0, %s211
      %s226 = sphi 0, %s212
      %s234 = sphi 0, %s236
      %s237 = sphi 0, %s234
      %s238 = sphi 0, %s237
      %s254 = sphi 0, %s238
    $region4: #{tpu_custom_call.1} parent=1 // loop_header_branch
      %27 = sbr.rel (%p25) target = $region8
    $region5: #{tpu_custom_call.1} parent=1 // loop_body
      %s29 = ssub.s32 %s24, 1
      %s30 = ssub.s32 %s24, 2
      %s37 = sadd.s32 1, %s32
      %p38 = scmp.ge.s32.totalorder %s37, 1
      %s39 = scalar_select %p38, 0, %s37
      %s40 = sadd.s32 1, %s31
      %s41 = scalar_select %p38, %s40, %s31
      %p42 = scmp.ge.s32.totalorder %s41, 2
      %s43 = scalar_select %p42, 0, %s41
      %s44 = ssub.s32 1, %s31
      %s45 = smul.u32 %s32, %s44
      %s46 = ssub.s32 1, %s43
      %s47 = smul.u32 %s39, %s46
      %s48 = ssub.s32 %s45, %s47
      %p49 = scmp.eq.s32.totalorder %s48, 0
      %s51 = sadd.s32 %s50, 1
      %s52 = scalar_select %p49, %s50, %s51
      %p55 = pneg %p49
      %p56 = scmp.eq.s32.totalorder %s24, 1
      %p57 = por %p55, %p56
      %p58 = scmp.ne.s32.totalorder %s50, %s53
      %p59 = scmp.eq.s32.totalorder %s24, 0
      %p60 = por %p58, %p59
      %p61 = scmp.ne.s32.totalorder %s50, %s53
      %p62 = scmp.eq.s32.totalorder %s29, 1
      %p63 = por %p61, %p62
      %p64 = scmp.ne.s32.totalorder %s53, %s54
      %p65 = scmp.eq.s32.totalorder %s29, 0
      %p66 = por %p64, %p65
      %p67 = scmp.ne.s32.totalorder %s53, %s54
      %p68 = scmp.eq.s32.totalorder %s30, 1
      %p69 = por %p67, %p68
      %p71 = scmp.ne.s32.totalorder %s54, %s70
      %p72 = scmp.eq.s32.totalorder %s30, 0
      %p73 = por %p71, %p72
      %s74 = ssub.s32 1, %s31
      %s75 = smul.u32 %s32, %s74
      %s76 = ssub.s32 1, %s43
      %s77 = smul.u32 %s39, %s76
      %s78 = ssub.s32 %s75, %s77
      %p79 = scmp.eq.s32.totalorder %s78, 0
      %s81 = sadd.s32 %s80, 1
      %s82 = scalar_select %p79, %s80, %s81
      %p85 = pneg %p79
      %p86 = scmp.eq.s32.totalorder %s24, 1
      %p87 = por %p85, %p86
      %p88 = scmp.ne.s32.totalorder %s80, %s83
      %p89 = scmp.eq.s32.totalorder %s24, 0
      %p90 = por %p88, %p89
      %p91 = scmp.ne.s32.totalorder %s80, %s83
      %p92 = scmp.eq.s32.totalorder %s29, 1
      %p93 = por %p91, %p92
      %p94 = scmp.ne.s32.totalorder %s83, %s84
      %p95 = scmp.eq.s32.totalorder %s29, 0
      %p96 = por %p94, %p95
      %p97 = scmp.ne.s32.totalorder %s83, %s84
      %p98 = scmp.eq.s32.totalorder %s30, 1
      %p99 = por %p97, %p98
      %p101 = scmp.ne.s32.totalorder %s84, %s100
      %p102 = scmp.eq.s32.totalorder %s30, 0
      %p103 = por %p101, %p102
      %s105 = sadd.s32 %s104, 1
      %p108 = scmp.eq.s32.totalorder %s24, 1
      %p109 = scmp.ne.s32.totalorder %s104, %s106
      %p110 = scmp.eq.s32.totalorder %s24, 0
      %p111 = por %p109, %p110
      %p112 = scmp.ne.s32.totalorder %s104, %s106
      %p113 = scmp.eq.s32.totalorder %s29, 1
      %p114 = por %p112, %p113
      %p115 = scmp.ne.s32.totalorder %s106, %s107
      %p116 = scmp.eq.s32.totalorder %s29, 0
      %p117 = por %p115, %p116
      %p118 = scmp.ne.s32.totalorder %s106, %s107
      %p119 = scmp.eq.s32.totalorder %s30, 1
      %p120 = por %p118, %p119
      %p122 = scmp.ne.s32.totalorder %s107, %s121
      %p123 = scmp.eq.s32.totalorder %s30, 0
      %p124 = por %p122, %p123
      %s126 = sadd.s32 %s125, 1
      %p129 = scmp.eq.s32.totalorder %s24, 1
      %p130 = scmp.ne.s32.totalorder %s125, %s127
      %p131 = scmp.eq.s32.totalorder %s24, 0
      %p132 = por %p130, %p131
      %p133 = scmp.ne.s32.totalorder %s125, %s127
      %p134 = scmp.eq.s32.totalorder %s29, 1
      %p135 = por %p133, %p134
      %p136 = scmp.ne.s32.totalorder %s127, %s128
      %p137 = scmp.eq.s32.totalorder %s29, 0
      %p138 = por %p136, %p137
      %p139 = scmp.ne.s32.totalorder %s127, %s128
      %p140 = scmp.eq.s32.totalorder %s30, 1
      %p141 = por %p139, %p140
      %p143 = scmp.ne.s32.totalorder %s128, %s142
      %p144 = scmp.eq.s32.totalorder %s30, 0
      %p145 = por %p143, %p144
      %s147 = sadd.s32 %s146, 1
      %p150 = scmp.eq.s32.totalorder %s24, 1
      %p151 = scmp.ne.s32.totalorder %s146, %s148
      %p152 = scmp.eq.s32.totalorder %s24, 0
      %p153 = por %p151, %p152
      %p154 = scmp.ne.s32.totalorder %s146, %s148
      %p155 = scmp.eq.s32.totalorder %s29, 1
      %p156 = por %p154, %p155
      %p157 = scmp.ne.s32.totalorder %s148, %s149
      %p158 = scmp.eq.s32.totalorder %s29, 0
      %p159 = por %p157, %p158
      %p160 = scmp.ne.s32.totalorder %s148, %s149
      %p161 = scmp.eq.s32.totalorder %s30, 1
      %p162 = por %p160, %p161
      %p164 = scmp.ne.s32.totalorder %s149, %s163
      %p165 = scmp.eq.s32.totalorder %s30, 0
      %p166 = por %p164, %p165
      %s168 = sadd.s32 %s167, 1
      %p171 = scmp.eq.s32.totalorder %s24, 1
      %p172 = scmp.ne.s32.totalorder %s167, %s169
      %p173 = scmp.eq.s32.totalorder %s24, 0
      %p174 = por %p172, %p173
      %p175 = scmp.ne.s32.totalorder %s167, %s169
      %p176 = scmp.eq.s32.totalorder %s29, 1
      %p177 = por %p175, %p176
      %p178 = scmp.ne.s32.totalorder %s169, %s170
      %p179 = scmp.eq.s32.totalorder %s29, 0
      %p180 = por %p178, %p179
      %p181 = scmp.ne.s32.totalorder %s169, %s170
      %p182 = scmp.eq.s32.totalorder %s30, 1
      %p183 = por %p181, %p182
      %p185 = scmp.ne.s32.totalorder %s170, %s184
      %p186 = scmp.eq.s32.totalorder %s30, 0
      %p187 = por %p185, %p186
      %s189 = sadd.s32 %s188, 1
      %p192 = scmp.eq.s32.totalorder %s24, 1
      %p193 = scmp.ne.s32.totalorder %s188, %s190
      %p194 = scmp.eq.s32.totalorder %s24, 0
      %p195 = por %p193, %p194
      %p196 = scmp.ne.s32.totalorder %s188, %s190
      %p197 = scmp.eq.s32.totalorder %s29, 1
      %p198 = por %p196, %p197
      %p199 = scmp.ne.s32.totalorder %s190, %s191
      %p200 = scmp.eq.s32.totalorder %s29, 0
      %p201 = por %p199, %p200
      %p202 = scmp.ne.s32.totalorder %s190, %s191
      %p203 = scmp.eq.s32.totalorder %s30, 1
      %p204 = por %p202, %p203
      %p206 = scmp.ne.s32.totalorder %s191, %s205
      %p207 = scmp.eq.s32.totalorder %s30, 0
      %p208 = por %p206, %p207
      %s210 = sadd.s32 %s209, 1
      %p213 = scmp.eq.s32.totalorder %s24, 1
      %p214 = scmp.ne.s32.totalorder %s209, %s211
      %p215 = scmp.eq.s32.totalorder %s24, 0
      %p216 = por %p214, %p215
      %p217 = scmp.ne.s32.totalorder %s209, %s211
      %p218 = scmp.eq.s32.totalorder %s29, 1
      %p219 = por %p217, %p218
      %p220 = scmp.ne.s32.totalorder %s211, %s212
      %p221 = scmp.eq.s32.totalorder %s29, 0
      %p222 = por %p220, %p221
      %p223 = scmp.ne.s32.totalorder %s211, %s212
      %p224 = scmp.eq.s32.totalorder %s30, 1
      %p225 = por %p223, %p224
      %p227 = scmp.ne.s32.totalorder %s212, %s226
      %p228 = scmp.eq.s32.totalorder %s30, 0
      %p229 = por %p227, %p228
      %s230 = smul.u32 %s32, %s31
      %s231 = smul.u32 %s39, %s43
      %s232 = ssub.s32 %s230, %s231
      %p233 = scmp.eq.s32.totalorder %s232, 0
      %s235 = sadd.s32 %s234, 1
      %s236 = scalar_select %p233, %s234, %s235
      %p239 = pneg %p233
      %p240 = scmp.eq.s32.totalorder %s24, 1
      %p241 = por %p239, %p240
      %p242 = scmp.ne.s32.totalorder %s234, %s237
      %p243 = scmp.eq.s32.totalorder %s24, 0
      %p244 = por %p242, %p243
      %p245 = scmp.ne.s32.totalorder %s234, %s237
      %p246 = scmp.eq.s32.totalorder %s29, 1
      %p247 = por %p245, %p246
      %p248 = scmp.ne.s32.totalorder %s237, %s238
      %p249 = scmp.eq.s32.totalorder %s29, 0
      %p250 = por %p248, %p249
      %p251 = scmp.ne.s32.totalorder %s237, %s238
      %p252 = scmp.eq.s32.totalorder %s30, 1
      %p253 = por %p251, %p252
      %p255 = scmp.ne.s32.totalorder %s238, %s254
      %p256 = scmp.eq.s32.totalorder %s30, 0
      %p257 = por %p255, %p256
      %p258 = scmp.le.s32.totalorder 1, %s24
      %p259 = scmp.lt.s32.totalorder %s24, 3
      %p260 = pnand %p258, %p259
      %p261 = pneg %p260
      // Predicated region
      $region9: #{tpu_custom_call.1} parent=5 // pred_check
        _
      $region10: #{tpu_custom_call.1} parent=5 // pred_check_branch
        %263 = sbr.rel (%p260) target = $region12
      $region11: #{tpu_custom_call.1} parent=5 // pred_region
        %s264 = ssub.s32 %s24, 1
        // Predicated region
        $region13: #{tpu_custom_call.1} parent=11 // pred_check
          %p265 = pneg %p117
        $region14: #{tpu_custom_call.1} parent=11 // pred_check_branch
          %267 = sbr.rel (%p265) target = $region16
        $region15: #{tpu_custom_call.1} parent=11 // pred_region
          %269 = vsyncadd [#allocation9], 0
          %s270 = sshll.u32 %s2, 4
          %s271 = int_to_ptr.hbm [resolvable:$true] %s270
          %s272 = sshll.u32 [#allocation10], 4
          %s273 = int_to_ptr.vmem [resolvable:$true] %s272
          %278 = dma.hbm_to_vmem [thread:$0]  %s271, 1024, %s273, [#allocation9], 128, 128, 8
        $region16: #{tpu_custom_call.1} parent=11 // pred_fallthru
          _
        // Predicated region
        $region17: #{tpu_custom_call.1} parent=11 // pred_check
          %p279 = pneg %p138
        $region18: #{tpu_custom_call.1} parent=11 // pred_check_branch
          %281 = sbr.rel (%p279) target = $region20
        $region19: #{tpu_custom_call.1} parent=11 // pred_region
          %283 = vsyncadd [#allocation12], 0
          %s284 = sshll.u32 %s3, 4
          %s285 = int_to_ptr.hbm [resolvable:$true] %s284
          %s286 = sshll.u32 [#allocation11], 4
          %s287 = int_to_ptr.vmem [resolvable:$true] %s286
          %292 = dma.hbm_to_vmem [thread:$0]  %s285, 1024, %s287, [#allocation12], 128, 128, 8
        $region20: #{tpu_custom_call.1} parent=11 // pred_fallthru
          _
        // Predicated region
        $region21: #{tpu_custom_call.1} parent=11 // pred_check
          %p293 = pneg %p159
        $region22: #{tpu_custom_call.1} parent=11 // pred_check_branch
          %295 = sbr.rel (%p293) target = $region24
        $region23: #{tpu_custom_call.1} parent=11 // pred_region
          _
        $region24: #{tpu_custom_call.1} parent=11 // pred_fallthru
          _
        // Predicated region
        $region25: #{tpu_custom_call.1} parent=11 // pred_check
          %p296 = pneg %p180
        $region26: #{tpu_custom_call.1} parent=11 // pred_check_branch
          %298 = sbr.rel (%p296) target = $region28
        $region27: #{tpu_custom_call.1} parent=11 // pred_region
          _
        $region28: #{tpu_custom_call.1} parent=11 // pred_fallthru
          _
        // Predicated region
        $region29: #{tpu_custom_call.1} parent=11 // pred_check
          %p299 = pneg %p201
        $region30: #{tpu_custom_call.1} parent=11 // pred_check_branch
          %301 = sbr.rel (%p299) target = $region32
        $region31: #{tpu_custom_call.1} parent=11 // pred_region
          _
        $region32: #{tpu_custom_call.1} parent=11 // pred_fallthru
          _
        // Predicated region
        $region33: #{tpu_custom_call.1} parent=11 // pred_check
          %p302 = pneg %p222
        $region34: #{tpu_custom_call.1} parent=11 // pred_check_branch
          %304 = sbr.rel (%p302) target = $region36
        $region35: #{tpu_custom_call.1} parent=11 // pred_region
          _
        $region36: #{tpu_custom_call.1} parent=11 // pred_fallthru
          _
      $region12: #{tpu_custom_call.1} parent=5 // pred_fallthru
        _
      %p305 = scmp.lt.s32.totalorder %s24, 2
      // Predicated region
      $region37: #{tpu_custom_call.1} parent=5 // pred_check
        %p306 = pneg %p305
      $region38: #{tpu_custom_call.1} parent=5 // pred_check_branch
        %308 = sbr.rel (%p306) target = $region40
      $region39: #{tpu_custom_call.1} parent=5 // pred_region
        // Predicated region
        $region41: #{tpu_custom_call.1} parent=39 // pred_check
          %p309 = pneg %p60
        $region42: #{tpu_custom_call.1} parent=39 // pred_check_branch
          %311 = sbr.rel (%p309) target = $region44
        $region43: #{tpu_custom_call.1} parent=39 // pred_region
          %s312 = sand.u32 %s50, 1
          %s313 = scalar_lea.sflag [#allocation6], %s312
          %s314 = sand.u32 %s50, 1
          %s315 = smul.addr %s314, 4
          %s316 = scalar_lea.vmem [#allocation5], %s315
          %s317 = ssub.s32 1, %s31
          %s318 = smul.u32 %s32, %s317
          %320 = vsyncadd %s313, 0
          %s321 = smul.addr %s318, 4
          %s322 = scalar_lea.hbm %s0, %s321
          %s324 = sshll.u32 %s322, 4
          %s325 = int_to_ptr.hbm [resolvable:$true] %s324
          %s326 = sshll.u32 %s316, 4
          %s327 = int_to_ptr.vmem [resolvable:$true] %s326
          %329 = dma.hbm_to_vmem [thread:$0]  %s325, 64, %s327, %s313
        $region44: #{tpu_custom_call.1} parent=39 // pred_fallthru
          _
        // Predicated region
        $region45: #{tpu_custom_call.1} parent=39 // pred_check
          %p330 = pneg %p90
        $region46: #{tpu_custom_call.1} parent=39 // pred_check_branch
          %332 = sbr.rel (%p330) target = $region48
        $region47: #{tpu_custom_call.1} parent=39 // pred_region
          %s333 = sand.u32 %s24, 1
          %s334 = scalar_lea.sflag [#allocation9], %s333
          %s335 = sand.u32 %s80, 1
          %s336 = smul.addr %s335, 16
          %s337 = scalar_lea.vmem [#allocation8], %s336
          %s338 = ssub.s32 1, %s31
          %s339 = smul.u32 %s32, %s338
          %341 = vsyncadd %s334, 0
          %s342 = smul.addr %s339, 4
          %s343 = scalar_lea.hbm %s1, %s342
          %s344 = sshll.u32 %s343, 4
          %s345 = int_to_ptr.hbm [resolvable:$true] %s344
          %s346 = sshll.u32 %s337, 4
          %s347 = int_to_ptr.vmem [resolvable:$true] %s346
          %352 = dma.hbm_to_vmem [thread:$0]  %s345, 256, %s347, %s334, 64, 64, 4
        $region48: #{tpu_custom_call.1} parent=39 // pred_fallthru
          _
      $region40: #{tpu_custom_call.1} parent=5 // pred_fallthru
        _
      %p353 = scmp.le.s32.totalorder 1, %s24
      %p354 = scmp.lt.s32.totalorder %s24, 3
      %p355 = pnand %p353, %p354
      %p356 = pneg %p355
      // Predicated region
      $region49: #{tpu_custom_call.1} parent=5 // pred_check
        _
      $region50: #{tpu_custom_call.1} parent=5 // pred_check_branch
        %358 = sbr.rel (%p355) target = $region52
      $region51: #{tpu_custom_call.1} parent=5 // pred_region
        %s359 = ssub.s32 %s24, 1
        %s360 = sand.u32 %s53, 1
        %s361 = scalar_lea.sflag [#allocation6], %s360
        %s362 = sand.u32 %s53, 1
        %s363 = smul.addr %s362, 4
        %s364 = scalar_lea.vmem [#allocation5], %s363
        // Predicated region
        $region53: #{tpu_custom_call.1} parent=51 // pred_check
          %p365 = pneg %p66
        $region54: #{tpu_custom_call.1} parent=51 // pred_check_branch
          %367 = sbr.rel (%p365) target = $region56
        $region55: #{tpu_custom_call.1} parent=51 // pred_region
          %369 = dma.done %s361, 64
        $region56: #{tpu_custom_call.1} parent=51 // pred_fallthru
          _
        %s370 = sand.u32 %s29, 1
        %s371 = scalar_lea.sflag [#allocation9], %s370
        %s372 = sand.u32 %s83, 1
        %s373 = smul.addr %s372, 16
        %s374 = scalar_lea.vmem [#allocation8], %s373
        // Predicated region
        $region57: #{tpu_custom_call.1} parent=51 // pred_check
          %p375 = pneg %p96
        $region58: #{tpu_custom_call.1} parent=51 // pred_check_branch
          %377 = sbr.rel (%p375) target = $region60
        $region59: #{tpu_custom_call.1} parent=51 // pred_region
          %379 = dma.done %s371, 256
        $region60: #{tpu_custom_call.1} parent=51 // pred_fallthru
          _
        // Predicated region
        $region61: #{tpu_custom_call.1} parent=51 // pred_check
          %p380 = pneg %p117
        $region62: #{tpu_custom_call.1} parent=51 // pred_check_branch
          %382 = sbr.rel (%p380) target = $region64
        $region63: #{tpu_custom_call.1} parent=51 // pred_region
          %384 = dma.done [#allocation9], 1024
        $region64: #{tpu_custom_call.1} parent=51 // pred_fallthru
          _
        // Predicated region
        $region65: #{tpu_custom_call.1} parent=51 // pred_check
          %p385 = pneg %p138
        $region66: #{tpu_custom_call.1} parent=51 // pred_check_branch
          %387 = sbr.rel (%p385) target = $region68
        $region67: #{tpu_custom_call.1} parent=51 // pred_region
          %389 = dma.done [#allocation12], 1024
        $region68: #{tpu_custom_call.1} parent=51 // pred_fallthru
          _
        %s390 = sand.u32 %s53, 1
        %s391 = scalar_lea.sflag [#allocation6], %s390
        %s392 = sand.u32 %s53, 1
        %s393 = smul.addr %s392, 4
        %s394 = scalar_lea.vmem [#allocation5], %s393
        %p395 = pneg %p66
        %p396 = pneg %p63
        %s397 = sand.u32 %s29, 1
        %s398 = scalar_lea.sflag [#allocation9], %s397
        %s399 = sand.u32 %s83, 1
        %s400 = smul.addr %s399, 16
        %s401 = scalar_lea.vmem [#allocation8], %s400
        %p402 = pneg %p96
        %p403 = pneg %p93
        %p404 = pneg %p117
        %p405 = pneg %p114
        %p406 = pneg %p138
        %p407 = pneg %p135
        %p408 = pneg %p159
        %p409 = pneg %p156
        %p410 = pneg %p180
        %p411 = pneg %p177
        %p412 = pneg %p201
        %p413 = pneg %p198
        %p414 = pneg %p222
        %p415 = pneg %p219
        %p416 = pneg %p250
        %p417 = pneg %p247
        %s418 = sand.u32 %s237, 1
        %s419 = scalar_lea.sflag [#allocation7], %s418
        %s420 = sand.u32 %s237, 1
        %s421 = smul.addr %s420, 8
        %s422 = scalar_lea.vmem [#allocation13], %s421
        %s423 = ssub.s32 1, %s33
        %s424 = smul.u32 %s34, %s423
        %s425 = ssub.s32 1, %s33
        %s426 = smul.u32 %s34, %s425
        %s427 = smul.u32 %s34, %s33
        %p429 = scmp.eq.s32.totalorder %s33, 0
        // Predicated region
        $region69: #{tpu_custom_call.1} parent=51 // pred_check
          %p430 = pneg %p429
        $region70: #{tpu_custom_call.1} parent=51 // pred_check_branch
          %432 = sbr.rel (%p430) target = $region72
        $region71: #{tpu_custom_call.1} parent=51 // pred_region
          %p433 = scmp.eq.s32.totalorder %s34, 0
          // Predicated region
          $region73: #{tpu_custom_call.1} parent=71 // pred_check
            %p434 = pneg %p433
          $region74: #{tpu_custom_call.1} parent=71 // pred_check_branch
            %436 = sbr.rel (%p434) target = $region76
          $region75: #{tpu_custom_call.1} parent=71 // pred_region
            %v437 = vlaneseq
            %vm438 = vcmp.ge.s32.totalorder %v437, 0
            %vm439 = vcmp.lt.s32.totalorder %v437, 256
            %vm440 = vmand %vm438, %vm439
            %441 = vst.msk [vmem:[#allocation3] sm:$0x3] %vm440, 0.0
          $region76: #{tpu_custom_call.1} parent=71 // pred_fallthru
            _
          %v442 = vld [vmem:[%s364] sm:$0xf]
          %v443 = vld [vmem:[%s374] sm:$0xf]
          %v444 = vunpack.c.l.bf16 %v443
          %s445 = scalar_lea.vmem %s374, 4 [#allocation8]
          %v446 = vld [vmem:[%s445] sm:$0xf]
          %v447 = vunpack.c.l.bf16 %v446
          %v448 = vadd.f32 %v444, %v447
          %s449 = scalar_lea.vmem %s374, 8 [#allocation8]
          %v450 = vld [vmem:[%s449] sm:$0xf]
          %v451 = vunpack.c.l.bf16 %v450
          %v452 = vadd.f32 %v448, %v451
          %s453 = scalar_lea.vmem %s374, 12 [#allocation8]
          %v454 = vld [vmem:[%s453] sm:$0xf]
          %v455 = vunpack.c.l.bf16 %v454
          %v456 = vadd.f32 %v452, %v455
          %v457 = vmul.f32 %v456, 0.25
          %v458 = vpack.c.bf16 %v457, %v457
          %v459 = vld [vmem:[#allocation10] sm:$0xff]
          %v460 = vld [vmem:[#allocation10 + $0x8] sm:$0xff]
          %v461 = vld [vmem:[#allocation10 + $0x10] sm:$0xff]
          %v462 = vld [vmem:[#allocation10 + $0x18] sm:$0xff]
          %v463 = vld [vmem:[#allocation10 + $0x20] sm:$0xff]
          %v464 = vld [vmem:[#allocation10 + $0x28] sm:$0xff]
          %v465 = vld [vmem:[#allocation10 + $0x30] sm:$0xff]
          %v466 = vld [vmem:[#allocation10 + $0x38] sm:$0xff]
          %v467 = vld [vmem:[%s4] sm:$0x3]
          %v469 = vperm.slane %v467, 0
          %v470 = vperm.slane %v467, 1
          %v481 = vunpack.c.l.b16 %v459
          %v482 = vunpack.c.h.b16 %v459
          %v483 = vunpack.c.l.b16 %v460
          %v484 = vunpack.c.h.b16 %v460
          %v485 = vunpack.c.l.b16 %v461
          %v486 = vunpack.c.h.b16 %v461
          %v487 = vunpack.c.l.b16 %v462
          %v488 = vunpack.c.h.b16 %v462
          %v489 = vunpack.c.l.b16 %v463
          %v490 = vunpack.c.h.b16 %v463
          %v491 = vunpack.c.l.b16 %v464
          %v492 = vunpack.c.h.b16 %v464
          %v493 = vunpack.c.l.b16 %v465
          %v494 = vunpack.c.h.b16 %v465
          %v495 = vunpack.c.l.b16 %v466
          %v496 = vunpack.c.h.b16 %v466
          %v497 = vpack.c.b16 %v483, %v481
          %v498 = vpack.c.b16 %v484, %v482
          %v499 = vpack.c.b16 %v487, %v485
          %v500 = vpack.c.b16 %v488, %v486
          %v501 = vpack.c.b16 %v491, %v489
          %v502 = vpack.c.b16 %v492, %v490
          %v503 = vpack.c.b16 %v495, %v493
          %v504 = vpack.c.b16 %v496, %v494
          %vm513 = vcmask 523264
          %v515 = vsel %vm513, %v442, 0
          %517 = vmatpush.bf16.msra.mxu0 0
          %518 = vmatpush.bf16.msra.mxu0 0
          %519 = vmatpush.bf16.msra.mxu0 0
          %520 = vmatpush.bf16.msra.mxu0 0
          %521 = vmatpush.bf16.msra.mxu0 %v503
          %522 = vmatpush.bf16.msra.mxu0 %v501
          %523 = vmatpush.bf16.msra.mxu0 %v499
          %524 = vmatpush.bf16.msra.mxu0 %v497
          %525 = vmatmul.bf16.gmra.mxu0 %v515
          %v526 = vpop.f32.mrf.mxu0
          %v527 = vadd.f32 %v469, %v526
          %v528 = vpop.f32.mrf.mxu0
          %529 = vdwg.mxu0
          %530 = vmatpush.bf16.msra.mxu0 0
          %531 = vmatpush.bf16.msra.mxu0 0
          %532 = vmatpush.bf16.msra.mxu0 0
          %533 = vmatpush.bf16.msra.mxu0 0
          %534 = vmatpush.bf16.msra.mxu0 %v504
          %535 = vmatpush.bf16.msra.mxu0 %v502
          %536 = vmatpush.bf16.msra.mxu0 %v500
          %537 = vmatpush.bf16.msra.mxu0 %v498
          %538 = vmatmul.bf16.gmra.mxu0 %v515
          %v539 = vpop.f32.mrf.mxu0
          %v540 = vadd.f32 %v470, %v539
          %v541 = vpop.f32.mrf.mxu0
          %542 = vdwg.mxu0
          %v543 = vld [vmem:[#allocation11] sm:$0xff]
          %v544 = vld [vmem:[#allocation11 + $0x8] sm:$0xff]
          %v545 = vld [vmem:[#allocation11 + $0x10] sm:$0xff]
          %v546 = vld [vmem:[#allocation11 + $0x18] sm:$0xff]
          %v547 = vld [vmem:[#allocation11 + $0x20] sm:$0xff]
          %v548 = vld [vmem:[#allocation11 + $0x28] sm:$0xff]
          %v549 = vld [vmem:[#allocation11 + $0x30] sm:$0xff]
          %v550 = vld [vmem:[#allocation11 + $0x38] sm:$0xff]
          %v551 = vld [vmem:[%s5] sm:$0x3]
          %v553 = vperm.slane %v551, 0
          %v554 = vperm.slane %v551, 1
          %v565 = vunpack.c.l.b16 %v543
          %v566 = vunpack.c.h.b16 %v543
          %v567 = vunpack.c.l.b16 %v544
          %v568 = vunpack.c.h.b16 %v544
          %v569 = vunpack.c.l.b16 %v545
          %v570 = vunpack.c.h.b16 %v545
          %v571 = vunpack.c.l.b16 %v546
          %v572 = vunpack.c.h.b16 %v546
          %v573 = vunpack.c.l.b16 %v547
          %v574 = vunpack.c.h.b16 %v547
          %v575 = vunpack.c.l.b16 %v548
          %v576 = vunpack.c.h.b16 %v548
          %v577 = vunpack.c.l.b16 %v549
          %v578 = vunpack.c.h.b16 %v549
          %v579 = vunpack.c.l.b16 %v550
          %v580 = vunpack.c.h.b16 %v550
          %v581 = vpack.c.b16 %v567, %v565
          %v582 = vpack.c.b16 %v568, %v566
          %v583 = vpack.c.b16 %v571, %v569
          %v584 = vpack.c.b16 %v572, %v570
          %v585 = vpack.c.b16 %v575, %v573
          %v586 = vpack.c.b16 %v576, %v574
          %v587 = vpack.c.b16 %v579, %v577
          %v588 = vpack.c.b16 %v580, %v578
          %v598 = vsel %vm513, %v458, 0
          %600 = vmatpush.bf16.msra.mxu0 0
          %601 = vmatpush.bf16.msra.mxu0 0
          %602 = vmatpush.bf16.msra.mxu0 0
          %603 = vmatpush.bf16.msra.mxu0 0
          %604 = vmatpush.bf16.msra.mxu0 %v587
          %605 = vmatpush.bf16.msra.mxu0 %v585
          %606 = vmatpush.bf16.msra.mxu0 %v583
          %607 = vmatpush.bf16.msra.mxu0 %v581
          %608 = vmatmul.bf16.gmra.mxu0 %v598
          %v609 = vpop.f32.mrf.mxu0
          %v610 = vadd.f32 %v553, %v609
          %v611 = vpop.f32.mrf.mxu0
          %612 = vdwg.mxu0
          %613 = vmatpush.bf16.msra.mxu0 0
          %614 = vmatpush.bf16.msra.mxu0 0
          %615 = vmatpush.bf16.msra.mxu0 0
          %616 = vmatpush.bf16.msra.mxu0 0
          %617 = vmatpush.bf16.msra.mxu0 %v588
          %618 = vmatpush.bf16.msra.mxu0 %v586
          %619 = vmatpush.bf16.msra.mxu0 %v584
          %620 = vmatpush.bf16.msra.mxu0 %v582
          %621 = vmatmul.bf16.gmra.mxu0 %v598
          %v622 = vpop.f32.mrf.mxu0
          %v623 = vadd.f32 %v554, %v622
          %v624 = vpop.f32.mrf.mxu0
          %625 = vdwg.mxu0
          %v626 = vadd.f32 %v527, %v610
          %v627 = vtanh.pop %v626
          %v628 = vmul.f32 %v627, %v623
          %s629 = smul.u32 %s34, 2
          %s630 = smul.addr %s629, 8
          %s631 = scalar_lea.vmem [#allocation2], %s630
          %632 = vst [vmem:[%s631] sm:$0xff] %v540
          %633 = vst [vmem:[%s631 + $0x8] sm:$0xff] %v628
          %v634 = vld [vmem:[#allocation3] sm:$0x1]
          %v635 = vmul.f32 %v540, %v540
          %v636 = vrot.slane %v635, 4
          %v637 = vadd.f32 %v635, %v636
          %v638 = vrot.slane %v637, 2
          %v639 = vadd.f32 %v637, %v638
          %v640 = vrot.slane %v639, 1
          %v641 = vadd.f32 %v639, %v640
          %v642 = vadd.f32 %v634, %v641
          %v643 = vlaneseq
          %vm644 = vcmp.ge.s32.totalorder %v643, 0
          %vm645 = vcmp.lt.s32.totalorder %v643, 128
          %vm646 = vmand %vm644, %vm645
          %647 = vst.msk [vmem:[#allocation3] sm:$0x1] %vm646, %v642
          %v648 = vld [vmem:[#allocation3 + $0x1] sm:$0x1]
          %v649 = vmul.f32 %v628, %v628
          %v650 = vrot.slane %v649, 4
          %v651 = vadd.f32 %v649, %v650
          %v652 = vrot.slane %v651, 2
          %v653 = vadd.f32 %v651, %v652
          %v654 = vrot.slane %v653, 1
          %v655 = vadd.f32 %v653, %v654
          %v656 = vadd.f32 %v648, %v655
          %657 = vst.msk [vmem:[#allocation3 + $0x1] sm:$0x1] %vm646, %v656
        $region72: #{tpu_custom_call.1} parent=51 // pred_fallthru
          _
        %p658 = scmp.eq.s32.totalorder %s33, 1
        // Predicated region
        $region77: #{tpu_custom_call.1} parent=51 // pred_check
          %p659 = pneg %p658
        $region78: #{tpu_custom_call.1} parent=51 // pred_check_branch
          %661 = sbr.rel (%p659) target = $region80
        $region79: #{tpu_custom_call.1} parent=51 // pred_region
          %p662 = scmp.eq.s32.totalorder %s34, 0
          // Predicated region
          $region81: #{tpu_custom_call.1} parent=79 // pred_check
            %p663 = pneg %p662
          $region82: #{tpu_custom_call.1} parent=79 // pred_check_branch
            %665 = sbr.rel (%p663) target = $region84
          $region83: #{tpu_custom_call.1} parent=79 // pred_region
            %v666 = vld [vmem:[#allocation3] sm:$0x3]
            %vm667 = vcmask 1040384
            %v668 = vsel %vm667, %v666, 0.0
            %669 = vadd.xlane.f32.xlu0 %v668
            %v670 = vpop.xlane.xlu0 %669
            %v672 = vperm.slane %v666, 1
            %v674 = vsel %vm667, %v672, 0.0
            %675 = vadd.xlane.f32.xlu0 %v674
            %v676 = vpop.xlane.xlu0 %675
            %v677 = vrsqrt.pop %v670
            %v678 = vmul.f32 %v677, %v670
            %v679 = vmul.f32 %v678, %v677
            %v680 = vmul.f32 0.5, %v679
            %v681 = vsub.f32 1.5, %v680
            %v682 = vmul.f32 %v677, %v681
            %v683 = vmul.f32 %v670, %v682
            %vm684 = vcmp.eq.f32.partialorder %v670, inf
            %v685 = vsel %vm684, %v670, %v683
            %vm686 = vcmp.eq.f32.partialorder %v670, 0.0
            %v687 = vand.u32 %v670, 2147483648
            %v688 = vsel %vm686, %v687, %v685
            %v689 = vmul.f32 %v688, 0.5
            %v690 = vrsqrt.pop %v676
            %v691 = vmul.f32 %v690, %v676
            %v692 = vmul.f32 %v691, %v690
            %v693 = vmul.f32 0.5, %v692
            %v694 = vsub.f32 1.5, %v693
            %v695 = vmul.f32 %v690, %v694
            %vm696 = vweird.f32 %v676
            %vm697 = vweird.f32 %v690
            %vm698 = vmor %vm696, %vm697
            %v699 = vsel %vm698, %v690, %v695
            %v700 = vmul.f32 %v689, %v699
            %v701 = vmin.f32 %v700, 1.0
            %vm702 = vcmask 0
            %703 = vst.msk [vmem:[#allocation4] sm:$0x1] %vm702, %v701
          $region84: #{tpu_custom_call.1} parent=79 // pred_fallthru
            _
          %v704 = vld [vmem:[#allocation4] sm:$0x1]
          %s705 = smul.u32 %s34, 2
          %s706 = smul.addr %s705, 8
          %s707 = scalar_lea.vmem [#allocation2], %s706
          %v708 = vld [vmem:[%s707] sm:$0xff]
          %v709 = vld [vmem:[%s707 + $0x8] sm:$0xff]
          %v711 = vperm.slane %v704, 0
          %712 = vset.pattern.permute.xlu0 0
          %713 = vperm.xlu0 %712, %v711
          %v714 = vpop.permute.xlu0 %713
          %v716 = vmul.f32 %v714, %v709
          %v717 = vadd.f32 %v708, %v716
          %718 = vadd.xlane.f32.xlu0 %v717
          %v719 = vpop.xlane.xlu0 %718
          %v720 = vrcp.pop 128.0
          %v721 = vmul.f32 128.0, %v720
          %v722 = vsub.f32 1.0, %v721
          %v723 = vmul.f32 %v720, %v722
          %v724 = vadd.f32 %v720, %v723
          %vm725 = vweird.f32 %v720
          %v726 = vsel %vm725, %v720, %v724
          %v727 = vmul.f32 %v719, %v726
          %v728 = vsub.f32 %v717, %v727
          %v729 = vmul.f32 %v728, %v728
          %730 = vadd.xlane.f32.xlu0 %v729
          %v731 = vpop.xlane.xlu0 %730
          %v732 = vmul.f32 %v731, %v726
          %v733 = vadd.f32 %v732, 1e-05
          %v734 = vrsqrt.pop %v733
          %v735 = vmul.f32 %v734, %v733
          %v736 = vmul.f32 %v735, %v734
          %v737 = vmul.f32 0.5, %v736
          %v738 = vsub.f32 1.5, %v737
          %v739 = vmul.f32 %v734, %v738
          %vm740 = vweird.f32 %v733
          %vm741 = vweird.f32 %v734
          %vm742 = vmor %vm740, %vm741
          %v743 = vsel %vm742, %v734, %v739
          %v744 = vmul.f32 %v728, %v743
          %v745 = vld [vmem:[%s6] sm:$0x1]
          %v747 = vperm.slane %v745, 0
          %v749 = vmul.f32 %v744, %v747
          %v750 = vld [vmem:[%s7] sm:$0x1]
          %v752 = vperm.slane %v750, 0
          %v754 = vadd.f32 %v749, %v752
          %755 = vst [vmem:[%s422] sm:$0xff] %v754
        $region80: #{tpu_custom_call.1} parent=51 // pred_fallthru
          _
        %s756 = sand.u32 %s237, 1
        %s757 = scalar_lea.sflag [#allocation7], %s756
        %s758 = sand.u32 %s237, 1
        %s759 = smul.addr %s758, 8
        %s760 = scalar_lea.vmem [#allocation13], %s759
        // Predicated region
        $region85: #{tpu_custom_call.1} parent=51 // pred_check
          %p761 = pneg %p247
        $region86: #{tpu_custom_call.1} parent=51 // pred_check_branch
          %763 = sbr.rel (%p761) target = $region88
        $region87: #{tpu_custom_call.1} parent=51 // pred_region
          %s764 = smul.u32 %s34, %s33
          %766 = vsyncadd %s757, 0
          %s767 = smul.addr %s764, 8
          %s768 = scalar_lea.hbm %s8, %s767
          %s770 = sshll.u32 %s760, 4
          %s771 = int_to_ptr.vmem [resolvable:$true] %s770
          %s772 = sshll.u32 %s768, 4
          %s773 = int_to_ptr.hbm [resolvable:$true] %s772
          %775 = dma.vmem_to_hbm [thread:$0]  %s771, 128, %s773, %s757
        $region88: #{tpu_custom_call.1} parent=51 // pred_fallthru
          _
      $region52: #{tpu_custom_call.1} parent=5 // pred_fallthru
        _
      %p776 = scmp.le.s32.totalorder 2, %s24
      // Predicated region
      $region89: #{tpu_custom_call.1} parent=5 // pred_check
        %p777 = pneg %p776
      $region90: #{tpu_custom_call.1} parent=5 // pred_check_branch
        %779 = sbr.rel (%p777) target = $region92
      $region91: #{tpu_custom_call.1} parent=5 // pred_region
        %s780 = ssub.s32 %s24, 2
        // Predicated region
        $region93: #{tpu_custom_call.1} parent=91 // pred_check
          %p781 = pneg %p253
        $region94: #{tpu_custom_call.1} parent=91 // pred_check_branch
          %783 = sbr.rel (%p781) target = $region96
        $region95: #{tpu_custom_call.1} parent=91 // pred_region
          %s784 = sand.u32 %s238, 1
          %s785 = scalar_lea.sflag [#allocation7], %s784
          %s786 = sand.u32 %s238, 1
          %s787 = smul.addr %s786, 8
          %s788 = scalar_lea.vmem [#allocation13], %s787
          %790 = dma.done %s785, 128
        $region96: #{tpu_custom_call.1} parent=91 // pred_fallthru
          _
      $region92: #{tpu_custom_call.1} parent=5 // pred_fallthru
        _
    $region6: #{tpu_custom_call.1} parent=1 // loop_footer
      %s28 = sadd.s32 1, %s24
    $region7: #{tpu_custom_call.1} parent=1 // loop_footer_branch
      %23 = sbr.rel target = $region3
    $region8: #{tpu_custom_call.1} parent=1 // loop_exit
      _
    %791 = vsyncpa [#allocation6], 1
    %s792 = scalar_lea.sflag [#allocation6], 1
    %793 = vsyncpa %s792, 1
    %794 = vsyncpa [#allocation9], 1
    %s795 = scalar_lea.sflag [#allocation9], 1
    %796 = vsyncpa %s795, 1
    %797 = vsyncpa [#allocation12], 1
    %798 = vsyncpa [#allocation7], 1
    %s799 = scalar_lea.sflag [#allocation7], 1
    %800 = vsyncpa %s799, 1

</llo_original>
